<compile_context>
chip_gen: v7x
topology: tpu7x:2x2x1
jax: 0.10.0
libtpu: 0.0.40
codegen_flags: <defaults>
</compile_context>

<pallas_src>
import functools

import jax
import jax.numpy as jnp
from jax import lax
from jax.experimental import pallas as pl
from jax.experimental.pallas import tpu as pltpu


# ---------------------------------------------------------------------------
# Lovasz kernel: loss from descending-sorted errors + co-sorted labels.
# ---------------------------------------------------------------------------
def _lovasz_from_sorted_kernel(err_ref, fg_ref, tri_ref, out_ref):
    """err_ref/fg_ref: (1, K, T) f32 (one row split into K lane tiles of width T).
    tri_ref: (T, T) bf16 inclusive upper triangle (tri[i, j] = i <= j).
    out_ref: (1, 1, 1) f32 per-row Lovasz loss."""
    err = err_ref[0]                       # (K, T)
    fg = fg_ref[0]                         # (K, T)
    k_tiles, t_lane = fg.shape

    # Intra-tile inclusive prefix sums on the MXU.  fg and tri are exactly {0, 1}
    # so bf16 operands with f32 accumulation are bit-exact.
    cs_local = jnp.dot(fg.astype(jnp.bfloat16), tri_ref[...],
                       preferred_element_type=jnp.float32)        # (K, T)

    # Cross-tile carries: exclusive prefix sum of per-tile totals (tiny matmul).
    tile_tot = jnp.sum(fg, axis=1, keepdims=True)                 # (K, 1)
    row_i = lax.broadcasted_iota(jnp.int32, (k_tiles, k_tiles), 0)
    col_i = lax.broadcasted_iota(jnp.int32, (k_tiles, k_tiles), 1)
    strict_lower = (col_i < row_i).astype(jnp.float32)
    carry = jnp.dot(strict_lower, tile_tot,
                    preferred_element_type=jnp.float32)           # (K, 1)

    cs_fg = cs_local + carry                                      # global cumsum(fg)
    gts = jnp.sum(fg)                                             # total foreground

    # Global 0-based position; cumsum(1 - fg) = (pos + 1) - cumsum(fg)  (VPU, no
    # second wide matmul needed).
    pos_i = (lax.broadcasted_iota(jnp.int32, (k_tiles, t_lane), 0) * t_lane
             + lax.broadcasted_iota(jnp.int32, (k_tiles, t_lane), 1))
    pos = pos_i.astype(jnp.float32)
    cs_bg = (pos + 1.0) - cs_fg

    jac = 1.0 - (gts - cs_fg) / (gts + cs_bg)
    # Jaccard at the previous sorted position (defined as 0 at position 0):
    # lovasz_grad[i] = jac[i] - jac[i-1], lovasz_grad[0] = jac[0].
    cs_fg_prev = cs_fg - fg
    jac_prev = jnp.where(pos_i == 0, 0.0,
                         1.0 - (gts - cs_fg_prev) / (gts + (pos - cs_fg_prev)))
    grad = jac - jac_prev

    # relu() matches lovasz_hinge_flat; it is a no-op for |fg - p| errors.
    loss = jnp.sum(jnp.maximum(err, 0.0) * grad, keepdims=True)   # (1, 1)
    out_ref[0] = loss


def _lovasz_from_errors(errors, fg, *, tile=256):
    """errors, fg: (R, P0) f32.  Returns (R,) per-row Lovasz losses."""
    assert tile % 128 == 0
    r, p0 = errors.shape

    # Single fused key-value descending sort (no argsort + two gathers).
    # TODO(synk): sort itself has no Pallas TPU primitive; done in XLA glue.
    neg_sorted, fg_sorted = lax.sort((-errors, fg), dimension=1, num_keys=1)
    err_sorted = -neg_sorted

    # Pad the *sorted* tail with (err=0, fg=0): padded entries contribute exactly 0.
    k_tiles = max(1, pl.cdiv(p0, tile))
    p_pad = k_tiles * tile
    if p_pad != p0:
        pad = ((0, 0), (0, p_pad - p0))
        err_sorted = jnp.pad(err_sorted, pad)
        fg_sorted = jnp.pad(fg_sorted, pad)
    err_sorted = err_sorted.reshape(r, k_tiles, tile)
    fg_sorted = fg_sorted.reshape(r, k_tiles, tile)

    idx = jnp.arange(tile, dtype=jnp.int32)
    tri = (idx[:, None] <= idx[None, :]).astype(jnp.bfloat16)      # (T, T), built once

    cost = pl.CostEstimate(
        flops=int(2 * r * k_tiles * tile * tile + 2 * r * k_tiles * k_tiles),
        transcendentals=0,
        bytes_accessed=int(2 * r * k_tiles * tile * 4 + tile * tile * 2 + r * 4),
    )
    losses = pl.pallas_call(
        _lovasz_from_sorted_kernel,
        grid=(r,),
        in_specs=[
            pl.BlockSpec((1, k_tiles, tile), lambda i: (i, 0, 0)),
            pl.BlockSpec((1, k_tiles, tile), lambda i: (i, 0, 0)),
            pl.BlockSpec((tile, tile), lambda i: (0, 0)),
        ],
        out_specs=pl.BlockSpec((1, 1, 1), lambda i: (i, 0, 0)),
        out_shape=jax.ShapeDtypeStruct((r, 1, 1), jnp.float32),
        compiler_params=pltpu.CompilerParams(dimension_semantics=("parallel",)),
        cost_estimate=cost,
    )(err_sorted, fg_sorted, tri)
    return losses[:, 0, 0]


# ---------------------------------------------------------------------------
# Fused one-pass statistics for bce / dice / jaccard / focal.
# ---------------------------------------------------------------------------
_N_STATS = 8  # [sum(p*t), sum(p), sum(p2*t), sum(p2), sum(t), bce_sum, focal_sum, focal_cnt]


def _stats_kernel(x_ref, t_ref, out_ref, *, ignore_index):
    """x_ref: (1,1,S,128) logits; t_ref: (1,1,S,128) targets (-1 marks padding).
    out_ref: (1, N_STATS, 128) per-channel partial sums, accumulated across tiles."""
    @pl.when(pl.program_id(1) == 0)
    def _():
        out_ref[...] = jnp.zeros_like(out_ref)

    x = x_ref[0, 0]                                  # (S, 128) logits
    t_raw = t_ref[0, 0]                              # (S, 128) targets
    valid = t_raw >= 0.0                             # padding mask
    t = jnp.where(valid, t_raw, 0.0)

    p = jax.nn.sigmoid(x)                            # sigmoid_input (EUP)
    p2 = jax.nn.sigmoid(p)                           # DiceLoss re-applies sigmoid
    p_m = jnp.where(valid, p, 0.0)
    p2_m = jnp.where(valid, p2, 0.0)

    # StableBCELoss terms (raw logits, raw targets).
    bce = jnp.maximum(x, 0.0) - x * t + jnp.log(1.0 + jnp.exp(-jnp.abs(x)))
    bce = jnp.where(valid, bce, 0.0)

    # FocalLoss2d terms (sigmoid probs, honors ignore_index; gamma = 2).
    f_valid = valid & (t_raw != float(ignore_index))
    pc = jnp.clip(p, 1e-8, 1.0 - 1e-8)
    tc = jnp.clip(t, 1e-8, 1.0 - 1e-8)
    pt = (1.0 - tc) * (1.0 - pc) + tc * pc
    focal = -jnp.square(1.0 - pt) * jnp.log(pt)
    focal = jnp.where(f_valid, focal, 0.0)
    f_cnt = jnp.where(f_valid, 1.0, 0.0)

    stats = (p_m * t, p_m, p2_m * t, p2_m, t, bce, focal, f_cnt)
    for k, v in enumerate(stats):
        out_ref[0, k:k + 1, :] += jnp.sum(v, axis=0, keepdims=True)


def _combo_stats(logits, targets, *, ignore_index, tile_elems=1024):
    """One pass over the data -> (C, N_STATS) sums."""
    assert tile_elems % 128 == 0
    b, c, h, w = logits.shape
    m = b * h * w
    x = jnp.transpose(logits, (1, 0, 2, 3)).reshape(c, m)
    t = jnp.transpose(targets, (1, 0, 2, 3)).reshape(c, m)

    sub = tile_elems // 128
    n_tiles = max(1, pl.cdiv(m, tile_elems))
    m_pad = n_tiles * tile_elems
    if m_pad != m:
        x = jnp.pad(x, ((0, 0), (0, m_pad - m)))
        t = jnp.pad(t, ((0, 0), (0, m_pad - m)), constant_values=-1.0)
    x = x.reshape(c, n_tiles, sub, 128)
    t = t.reshape(c, n_tiles, sub, 128)

    out = pl.pallas_call(
        functools.partial(_stats_kernel, ignore_index=ignore_index),
        grid=(c, n_tiles),
        in_specs=[
            pl.BlockSpec((1, 1, sub, 128), lambda ci, ti: (ci, ti, 0, 0)),
            pl.BlockSpec((1, 1, sub, 128), lambda ci, ti: (ci, ti, 0, 0)),
        ],
        out_specs=pl.BlockSpec((1, _N_STATS, 128), lambda ci, ti: (ci, 0, 0)),
        out_shape=jax.ShapeDtypeStruct((c, _N_STATS, 128), jnp.float32),
        compiler_params=pltpu.CompilerParams(
            dimension_semantics=("parallel", "arbitrary")),
    )(x, t)
    return jnp.sum(out, axis=-1)                     # (C, N_STATS)


# ---------------------------------------------------------------------------
# ComboLoss forward.
# ---------------------------------------------------------------------------
def combo_loss(outputs, targets, weights, *, per_image=False,
               channel_weights=(1.0, 0.5, 0.5), channel_losses=None,
               ignore_index=255, lovasz_tile=256, stats_tile=1024):
    """Forward pass of ComboLoss.  `outputs` are logits [B,C,H,W], `targets` [B,C,H,W]."""
    b, c, h, w = outputs.shape
    logits = outputs.astype(jnp.float32)
    tgt = targets.astype(jnp.float32)

    def enabled(name, ci):
        return channel_losses is None or name in channel_losses[ci]

    values = {}

    if any(weights.get(k, 0) for k in ("bce", "dice", "jaccard", "focal")):
        stats = _combo_stats(logits, tgt, ignore_index=ignore_index,
                             tile_elems=stats_tile)
        s_pt, s_p, s_p2t, s_p2, s_t, s_bce, s_foc, s_fcnt = (
            stats[:, k] for k in range(_N_STATS))
        if weights.get("bce", 0):
            values["bce"] = jnp.sum(s_bce) / float(b * c * h * w)
        if weights.get("dice", 0):
            dice_c = 1.0 - (2.0 * s_p2t + 1.0) / (s_p2 + s_t + 1.0)
            values["dice"] = sum(channel_weights[ci] * dice_c[ci]
                                 for ci in range(c) if enabled("dice", ci))
        if weights.get("jaccard", 0):
            jac_c = 1.0 - (s_pt + 1e-3) / (s_p + s_t - s_pt + 1e-3)
            values["jaccard"] = sum(channel_weights[ci] * jac_c[ci]
                                    for ci in range(c) if enabled("jaccard", ci))
        if weights.get("focal", 0):
            values["focal"] = jnp.sum(s_foc) / jnp.maximum(jnp.sum(s_fcnt), 1.0)

    if weights.get("lovasz", 0):
        # symmetric_lovasz -> lovasz_hinge with per_image=True, ignore=None
        # (module defaults; LovaszLoss's own per_image/ignore are never forwarded).
        x_flat = logits.reshape(b, c * h * w)
        t_flat = tgt.reshape(b, c * h * w)
        err = 1.0 - x_flat * (2.0 * t_flat - 1.0)    # identical for both symmetric terms
        err2 = jnp.concatenate([err, err], axis=0)   # (2B, P)
        fg2 = jnp.concatenate([t_flat, 1.0 - t_flat], axis=0)
        values["lovasz"] = jnp.mean(_lovasz_from_errors(err2, fg2, tile=lovasz_tile))

    if weights.get("lovasz_sigmoid", 0):
        probs = jax.nn.sigmoid(jnp.transpose(logits, (1, 0, 2, 3))).reshape(c, b * h * w)
        labs = jnp.transpose(tgt, (1, 0, 2, 3)).reshape(c, b * h * w)
        valid = labs != float(ignore_index)
        fg = jnp.where(valid, labs, 0.0)
        # Ignored pixels get err=0/fg=0: they sort to the tail and contribute
        # exactly 0, equivalent to flatten_binary_scores removing them.
        err = jnp.where(valid, jnp.abs(fg - probs), 0.0)
        if per_image:
            row_losses = _lovasz_from_errors(err.reshape(c * b, h * w),
                                             fg.reshape(c * b, h * w),
                                             tile=lovasz_tile)
            chan_losses = row_losses.reshape(c, b).mean(axis=1)
        else:
            chan_losses = _lovasz_from_errors(err, fg, tile=lovasz_tile)
        values["lovasz_sigmoid"] = sum(channel_weights[ci] * chan_losses[ci]
                                       for ci in range(c)
                                       if enabled("lovasz_sigmoid", ci))

    total = 0.0
    for k, wgt in weights.items():
        if not wgt:
            continue
        total = total + wgt * values[k]
    return jnp.maximum(total, 1e-5)                  # .clamp(min=1e-05)


if __name__ == "__main__":
    key = jax.random.PRNGKey(0)
    k1, k2 = jax.random.split(key)

    B, C, H, W = 2, 3, 32, 32
    logits = jax.random.normal(k1, (B, C, H, W), dtype=jnp.float32)
    targets = jax.random.bernoulli(k2, 0.35, (B, C, H, W)).astype(jnp.float32)

    weights = {"bce": 1.0, "dice": 0.5, "focal": 2.0, "jaccard": 0.3,
               "lovasz": 0.5, "lovasz_sigmoid": 0.5}
    loss = combo_loss(logits, targets, weights, per_image=False,
                      channel_weights=(1.0, 0.5, 0.5), channel_losses=None,
                      ignore_index=255)
    jax.block_until_ready(loss)
    print("KERNEL_OK")
</pallas_src>

<mosaic_0001>
module attributes {stable_mosaic.version = 11 : i64} {
  func.func @_stats_kernel(%arg0: i32, %arg1: i32, %arg2: memref<1x1x8x128xf32, #tpu.memory_space<vmem>>, %arg3: memref<1x1x8x128xf32, #tpu.memory_space<vmem>>, %arg4: memref<1x8x128xf32, #tpu.memory_space<vmem>>) attributes {dimension_semantics = [#tpu.dimension_semantics<parallel>, #tpu.dimension_semantics<arbitrary>], iteration_bounds = array<i64: 3, 2>, scalar_prefetch = 0 : i64, scratch_operands = 0 : i64, tpu.core_type = #tpu.core_type<tc>, window_params = [{transform_indices = @transform_0, window_bounds = array<i64: 1, 1, 8, 128>}, {transform_indices = @transform_1, window_bounds = array<i64: 1, 1, 8, 128>}, {transform_indices = @transform_2, window_bounds = array<i64: 1, 8, 128>}]} {
    %c0_i32 = arith.constant 0 : i32
    %0 = arith.cmpi eq, %arg1, %c0_i32 : i32
    %1 = arith.extui %0 : i1 to i32
    %c0_i32_0 = arith.constant 0 : i32
    %2 = arith.cmpi ne, %1, %c0_i32_0 : i32
    scf.if %2 {
      %cst_78 = arith.constant 0.000000e+00 : f32
      %135 = vector.broadcast %cst_78 : f32 to vector<1x8x128xf32>
      %c0_79 = arith.constant 0 : index
      %c0_80 = arith.constant 0 : index
      %c0_81 = arith.constant 0 : index
      %136 = vector.load %arg4[%c0_79, %c0_80, %c0_81] : memref<1x8x128xf32, #tpu.memory_space<vmem>>, vector<1x8x128xf32>
      tpu.vector_store %arg4[%c0_79, %c0_80, %c0_81], %135 {strides = array<i32>} : memref<1x8x128xf32, #tpu.memory_space<vmem>>, vector<1x8x128xf32>,
    } else {
    }
    %c0 = arith.constant 0 : index
    %c0_1 = arith.constant 0 : index
    %c0_2 = arith.constant 0 : index
    %c0_3 = arith.constant 0 : index
    %3 = vector.load %arg2[%c0, %c0_1, %c0_2, %c0_3] : memref<1x1x8x128xf32, #tpu.memory_space<vmem>>, vector<1x1x8x128xf32>
    %4 = vector.shape_cast %3 : vector<1x1x8x128xf32> to vector<8x128xf32>
    %c0_4 = arith.constant 0 : index
    %c0_5 = arith.constant 0 : index
    %c0_6 = arith.constant 0 : index
    %c0_7 = arith.constant 0 : index
    %5 = vector.load %arg3[%c0_4, %c0_5, %c0_6, %c0_7] : memref<1x1x8x128xf32, #tpu.memory_space<vmem>>, vector<1x1x8x128xf32>
    %6 = vector.shape_cast %5 : vector<1x1x8x128xf32> to vector<8x128xf32>
    %cst = arith.constant 0.000000e+00 : f32
    %7 = vector.broadcast %cst : f32 to vector<8x128xf32>
    %8 = arith.cmpf oge, %6, %7 : vector<8x128xf32>
    %cst_8 = arith.constant 0.000000e+00 : f32
    %9 = vector.broadcast %cst_8 : f32 to vector<8x128xf32>
    %10 = arith.select %8, %6, %9 : vector<8x128xi1>, vector<8x128xf32>
    %11 = arith.negf %4 : vector<8x128xf32>
    %12 = math.exp %11 : vector<8x128xf32>
    %cst_9 = arith.constant 1.000000e+00 : f32
    %13 = vector.broadcast %cst_9 : f32 to vector<8x128xf32>
    %14 = arith.addf %13, %12 : vector<8x128xf32>
    %15 = arith.divf %13, %14 : vector<8x128xf32>
    %16 = arith.negf %15 : vector<8x128xf32>
    %17 = math.exp %16 : vector<8x128xf32>
    %cst_10 = arith.constant 1.000000e+00 : f32
    %18 = vector.broadcast %cst_10 : f32 to vector<8x128xf32>
    %19 = arith.addf %18, %17 : vector<8x128xf32>
    %20 = arith.divf %18, %19 : vector<8x128xf32>
    %cst_11 = arith.constant 0.000000e+00 : f32
    %21 = vector.broadcast %cst_11 : f32 to vector<8x128xf32>
    %22 = arith.select %8, %15, %21 : vector<8x128xi1>, vector<8x128xf32>
    %cst_12 = arith.constant 0.000000e+00 : f32
    %23 = vector.broadcast %cst_12 : f32 to vector<8x128xf32>
    %24 = arith.select %8, %20, %23 : vector<8x128xi1>, vector<8x128xf32>
    %cst_13 = arith.constant 0.000000e+00 : f32
    %25 = vector.broadcast %cst_13 : f32 to vector<8x128xf32>
    %26 = arith.maximumf %4, %25 : vector<8x128xf32>
    %27 = arith.mulf %4, %10 : vector<8x128xf32>
    %28 = arith.subf %26, %27 : vector<8x128xf32>
    %29 = math.absf %4 : vector<8x128xf32>
    %cst_14 = arith.constant 0.000000e+00 : f32
    %30 = vector.broadcast %cst_14 : f32 to vector<8x128xf32>
    %31 = arith.subf %30, %29 : vector<8x128xf32>
    %32 = math.exp %31 : vector<8x128xf32>
    %cst_15 = arith.constant 1.000000e+00 : f32
    %33 = vector.broadcast %cst_15 : f32 to vector<8x128xf32>
    %34 = arith.addf %33, %32 : vector<8x128xf32>
    %35 = math.log %34 : vector<8x128xf32>
    %36 = arith.addf %28, %35 : vector<8x128xf32>
    %cst_16 = arith.constant 0.000000e+00 : f32
    %37 = vector.broadcast %cst_16 : f32 to vector<8x128xf32>
    %38 = arith.select %8, %36, %37 : vector<8x128xi1>, vector<8x128xf32>
    %cst_17 = arith.constant 2.550000e+02 : f32
    %39 = vector.broadcast %cst_17 : f32 to vector<8x128xf32>
    %40 = arith.cmpf one, %6, %39 : vector<8x128xf32>
    %41 = arith.andi %8, %40 : vector<8x128xi1>
    %cst_18 = arith.constant 9.99999993E-9 : f32
    %cst_19 = arith.constant 1.000000e+00 : f32
    %42 = vector.broadcast %cst_18 : f32 to vector<8x128xf32>
    %43 = arith.maximumf %42, %15 : vector<8x128xf32>
    %44 = vector.broadcast %cst_19 : f32 to vector<8x128xf32>
    %45 = arith.minimumf %44, %43 : vector<8x128xf32>
    %cst_20 = arith.constant 9.99999993E-9 : f32
    %cst_21 = arith.constant 1.000000e+00 : f32
    %46 = vector.broadcast %cst_20 : f32 to vector<8x128xf32>
    %47 = arith.maximumf %46, %10 : vector<8x128xf32>
    %48 = vector.broadcast %cst_21 : f32 to vector<8x128xf32>
    %49 = arith.minimumf %48, %47 : vector<8x128xf32>
    %cst_22 = arith.constant 1.000000e+00 : f32
    %50 = vector.broadcast %cst_22 : f32 to vector<8x128xf32>
    %51 = arith.subf %50, %49 : vector<8x128xf32>
    %cst_23 = arith.constant 1.000000e+00 : f32
    %52 = vector.broadcast %cst_23 : f32 to vector<8x128xf32>
    %53 = arith.subf %52, %45 : vector<8x128xf32>
    %54 = arith.mulf %51, %53 : vector<8x128xf32>
    %55 = arith.mulf %49, %45 : vector<8x128xf32>
    %56 = arith.addf %54, %55 : vector<8x128xf32>
    %cst_24 = arith.constant 1.000000e+00 : f32
    %57 = vector.broadcast %cst_24 : f32 to vector<8x128xf32>
    %58 = arith.subf %57, %56 : vector<8x128xf32>
    %59 = arith.mulf %58, %58 : vector<8x128xf32>
    %cst_25 = arith.constant 0.000000e+00 : f32
    %60 = vector.broadcast %cst_25 : f32 to vector<8x128xf32>
    %61 = arith.subf %60, %59 : vector<8x128xf32>
    %62 = math.log %56 : vector<8x128xf32>
    %63 = arith.mulf %61, %62 : vector<8x128xf32>
    %cst_26 = arith.constant 0.000000e+00 : f32
    %64 = vector.broadcast %cst_26 : f32 to vector<8x128xf32>
    %65 = arith.select %41, %63, %64 : vector<8x128xi1>, vector<8x128xf32>
    %cst_27 = arith.constant 1.000000e+00 : f32
    %cst_28 = arith.constant 0.000000e+00 : f32
    %66 = vector.broadcast %cst_27 : f32 to vector<8x128xf32>
    %67 = vector.broadcast %cst_28 : f32 to vector<8x128xf32>
    %68 = arith.select %41, %66, %67 : vector<8x128xi1>, vector<8x128xf32>
    %69 = arith.mulf %22, %10 : vector<8x128xf32>
    %70 = arith.mulf %24, %10 : vector<8x128xf32>
    %c0_29 = arith.constant 0 : index
    %c0_30 = arith.constant 0 : index
    %c0_31 = arith.constant 0 : index
    %71 = vector.load %arg4[%c0_29, %c0_30, %c0_31] : memref<1x8x128xf32, #tpu.memory_space<vmem>>, vector<1x1x128xf32>
    %72 = vector.shape_cast %71 : vector<1x1x128xf32> to vector<1x128xf32>
    %cst_32 = arith.constant dense<0.000000e+00> : vector<128xf32>
    %73 = vector.multi_reduction <add>, %69, %cst_32 [0] : vector<8x128xf32> to vector<128xf32>
    %74 = vector.shape_cast %73 : vector<128xf32> to vector<1x128xf32>
    %75 = arith.addf %72, %74 : vector<1x128xf32>
    %c0_33 = arith.constant 0 : index
    %c0_34 = arith.constant 0 : index
    %c0_35 = arith.constant 0 : index
    %76 = vector.load %arg4[%c0_33, %c0_34, %c0_35] : memref<1x8x128xf32, #tpu.memory_space<vmem>>, vector<1x1x128xf32>
    %77 = vector.shape_cast %76 : vector<1x1x128xf32> to vector<1x128xf32>
    %78 = vector.shape_cast %75 : vector<1x128xf32> to vector<1x1x128xf32>
    tpu.vector_store %arg4[%c0_33, %c0_34, %c0_35], %78 {strides = array<i32>} : memref<1x8x128xf32, #tpu.memory_space<vmem>>, vector<1x1x128xf32>,
    %c0_36 = arith.constant 0 : index
    %c1 = arith.constant 1 : index
    %c0_37 = arith.constant 0 : index
    %79 = vector.load %arg4[%c0_36, %c1, %c0_37] : memref<1x8x128xf32, #tpu.memory_space<vmem>>, vector<1x1x128xf32>
    %80 = vector.shape_cast %79 : vector<1x1x128xf32> to vector<1x128xf32>
    %cst_38 = arith.constant dense<0.000000e+00> : vector<128xf32>
    %81 = vector.multi_reduction <add>, %22, %cst_38 [0] : vector<8x128xf32> to vector<128xf32>
    %82 = vector.shape_cast %81 : vector<128xf32> to vector<1x128xf32>
    %83 = arith.addf %80, %82 : vector<1x128xf32>
    %c0_39 = arith.constant 0 : index
    %c1_40 = arith.constant 1 : index
    %c0_41 = arith.constant 0 : index
    %84 = vector.load %arg4[%c0_39, %c1_40, %c0_41] : memref<1x8x128xf32, #tpu.memory_space<vmem>>, vector<1x1x128xf32>
    %85 = vector.shape_cast %84 : vector<1x1x128xf32> to vector<1x128xf32>
    %86 = vector.shape_cast %83 : vector<1x128xf32> to vector<1x1x128xf32>
    tpu.vector_store %arg4[%c0_39, %c1_40, %c0_41], %86 {strides = array<i32>} : memref<1x8x128xf32, #tpu.memory_space<vmem>>, vector<1x1x128xf32>,
    %c0_42 = arith.constant 0 : index
    %c2 = arith.constant 2 : index
    %c0_43 = arith.constant 0 : index
    %87 = vector.load %arg4[%c0_42, %c2, %c0_43] : memref<1x8x128xf32, #tpu.memory_space<vmem>>, vector<1x1x128xf32>
    %88 = vector.shape_cast %87 : vector<1x1x128xf32> to vector<1x128xf32>
    %cst_44 = arith.constant dense<0.000000e+00> : vector<128xf32>
    %89 = vector.multi_reduction <add>, %70, %cst_44 [0] : vector<8x128xf32> to vector<128xf32>
    %90 = vector.shape_cast %89 : vector<128xf32> to vector<1x128xf32>
    %91 = arith.addf %88, %90 : vector<1x128xf32>
    %c0_45 = arith.constant 0 : index
    %c2_46 = arith.constant 2 : index
    %c0_47 = arith.constant 0 : index
    %92 = vector.load %arg4[%c0_45, %c2_46, %c0_47] : memref<1x8x128xf32, #tpu.memory_space<vmem>>, vector<1x1x128xf32>
    %93 = vector.shape_cast %92 : vector<1x1x128xf32> to vector<1x128xf32>
    %94 = vector.shape_cast %91 : vector<1x128xf32> to vector<1x1x128xf32>
    tpu.vector_store %arg4[%c0_45, %c2_46, %c0_47], %94 {strides = array<i32>} : memref<1x8x128xf32, #tpu.memory_space<vmem>>, vector<1x1x128xf32>,
    %c0_48 = arith.constant 0 : index
    %c3 = arith.constant 3 : index
    %c0_49 = arith.constant 0 : index
    %95 = vector.load %arg4[%c0_48, %c3, %c0_49] : memref<1x8x128xf32, #tpu.memory_space<vmem>>, vector<1x1x128xf32>
    %96 = vector.shape_cast %95 : vector<1x1x128xf32> to vector<1x128xf32>
    %cst_50 = arith.constant dense<0.000000e+00> : vector<128xf32>
    %97 = vector.multi_reduction <add>, %24, %cst_50 [0] : vector<8x128xf32> to vector<128xf32>
    %98 = vector.shape_cast %97 : vector<128xf32> to vector<1x128xf32>
    %99 = arith.addf %96, %98 : vector<1x128xf32>
    %c0_51 = arith.constant 0 : index
    %c3_52 = arith.constant 3 : index
    %c0_53 = arith.constant 0 : index
    %100 = vector.load %arg4[%c0_51, %c3_52, %c0_53] : memref<1x8x128xf32, #tpu.memory_space<vmem>>, vector<1x1x128xf32>
    %101 = vector.shape_cast %100 : vector<1x1x128xf32> to vector<1x128xf32>
    %102 = vector.shape_cast %99 : vector<1x128xf32> to vector<1x1x128xf32>
    tpu.vector_store %arg4[%c0_51, %c3_52, %c0_53], %102 {strides = array<i32>} : memref<1x8x128xf32, #tpu.memory_space<vmem>>, vector<1x1x128xf32>,
    %c0_54 = arith.constant 0 : index
    %c4 = arith.constant 4 : index
    %c0_55 = arith.constant 0 : index
    %103 = vector.load %arg4[%c0_54, %c4, %c0_55] : memref<1x8x128xf32, #tpu.memory_space<vmem>>, vector<1x1x128xf32>
    %104 = vector.shape_cast %103 : vector<1x1x128xf32> to vector<1x128xf32>
    %cst_56 = arith.constant dense<0.000000e+00> : vector<128xf32>
    %105 = vector.multi_reduction <add>, %10, %cst_56 [0] : vector<8x128xf32> to vector<128xf32>
    %106 = vector.shape_cast %105 : vector<128xf32> to vector<1x128xf32>
    %107 = arith.addf %104, %106 : vector<1x128xf32>
    %c0_57 = arith.constant 0 : index
    %c4_58 = arith.constant 4 : index
    %c0_59 = arith.constant 0 : index
    %108 = vector.load %arg4[%c0_57, %c4_58, %c0_59] : memref<1x8x128xf32, #tpu.memory_space<vmem>>, vector<1x1x128xf32>
    %109 = vector.shape_cast %108 : vector<1x1x128xf32> to vector<1x128xf32>
    %110 = vector.shape_cast %107 : vector<1x128xf32> to vector<1x1x128xf32>
    tpu.vector_store %arg4[%c0_57, %c4_58, %c0_59], %110 {strides = array<i32>} : memref<1x8x128xf32, #tpu.memory_space<vmem>>, vector<1x1x128xf32>,
    %c0_60 = arith.constant 0 : index
    %c5 = arith.constant 5 : index
    %c0_61 = arith.constant 0 : index
    %111 = vector.load %arg4[%c0_60, %c5, %c0_61] : memref<1x8x128xf32, #tpu.memory_space<vmem>>, vector<1x1x128xf32>
    %112 = vector.shape_cast %111 : vector<1x1x128xf32> to vector<1x128xf32>
    %cst_62 = arith.constant dense<0.000000e+00> : vector<128xf32>
    %113 = vector.multi_reduction <add>, %38, %cst_62 [0] : vector<8x128xf32> to vector<128xf32>
    %114 = vector.shape_cast %113 : vector<128xf32> to vector<1x128xf32>
    %115 = arith.addf %112, %114 : vector<1x128xf32>
    %c0_63 = arith.constant 0 : index
    %c5_64 = arith.constant 5 : index
    %c0_65 = arith.constant 0 : index
    %116 = vector.load %arg4[%c0_63, %c5_64, %c0_65] : memref<1x8x128xf32, #tpu.memory_space<vmem>>, vector<1x1x128xf32>
    %117 = vector.shape_cast %116 : vector<1x1x128xf32> to vector<1x128xf32>
    %118 = vector.shape_cast %115 : vector<1x128xf32> to vector<1x1x128xf32>
    tpu.vector_store %arg4[%c0_63, %c5_64, %c0_65], %118 {strides = array<i32>} : memref<1x8x128xf32, #tpu.memory_space<vmem>>, vector<1x1x128xf32>,
    %c0_66 = arith.constant 0 : index
    %c6 = arith.constant 6 : index
    %c0_67 = arith.constant 0 : index
    %119 = vector.load %arg4[%c0_66, %c6, %c0_67] : memref<1x8x128xf32, #tpu.memory_space<vmem>>, vector<1x1x128xf32>
    %120 = vector.shape_cast %119 : vector<1x1x128xf32> to vector<1x128xf32>
    %cst_68 = arith.constant dense<0.000000e+00> : vector<128xf32>
    %121 = vector.multi_reduction <add>, %65, %cst_68 [0] : vector<8x128xf32> to vector<128xf32>
    %122 = vector.shape_cast %121 : vector<128xf32> to vector<1x128xf32>
    %123 = arith.addf %120, %122 : vector<1x128xf32>
    %c0_69 = arith.constant 0 : index
    %c6_70 = arith.constant 6 : index
    %c0_71 = arith.constant 0 : index
    %124 = vector.load %arg4[%c0_69, %c6_70, %c0_71] : memref<1x8x128xf32, #tpu.memory_space<vmem>>, vector<1x1x128xf32>
    %125 = vector.shape_cast %124 : vector<1x1x128xf32> to vector<1x128xf32>
    %126 = vector.shape_cast %123 : vector<1x128xf32> to vector<1x1x128xf32>
    tpu.vector_store %arg4[%c0_69, %c6_70, %c0_71], %126 {strides = array<i32>} : memref<1x8x128xf32, #tpu.memory_space<vmem>>, vector<1x1x128xf32>,
    %c0_72 = arith.constant 0 : index
    %c7 = arith.constant 7 : index
    %c0_73 = arith.constant 0 : index
    %127 = vector.load %arg4[%c0_72, %c7, %c0_73] : memref<1x8x128xf32, #tpu.memory_space<vmem>>, vector<1x1x128xf32>
    %128 = vector.shape_cast %127 : vector<1x1x128xf32> to vector<1x128xf32>
    %cst_74 = arith.constant dense<0.000000e+00> : vector<128xf32>
    %129 = vector.multi_reduction <add>, %68, %cst_74 [0] : vector<8x128xf32> to vector<128xf32>
    %130 = vector.shape_cast %129 : vector<128xf32> to vector<1x128xf32>
    %131 = arith.addf %128, %130 : vector<1x128xf32>
    %c0_75 = arith.constant 0 : index
    %c7_76 = arith.constant 7 : index
    %c0_77 = arith.constant 0 : index
    %132 = vector.load %arg4[%c0_75, %c7_76, %c0_77] : memref<1x8x128xf32, #tpu.memory_space<vmem>>, vector<1x1x128xf32>
    %133 = vector.shape_cast %132 : vector<1x1x128xf32> to vector<1x128xf32>
    %134 = vector.shape_cast %131 : vector<1x128xf32> to vector<1x1x128xf32>
    tpu.vector_store %arg4[%c0_75, %c7_76, %c0_77], %134 {strides = array<i32>} : memref<1x8x128xf32, #tpu.memory_space<vmem>>, vector<1x1x128xf32>,
    return
  }
  func.func @transform_0(%arg0: i32, %arg1: i32) -> (i32, i32, i32, i32) {
    %c0_i32 = arith.constant 0 : i32
    %c0_i32_0 = arith.constant 0 : i32
    %c0_i32_1 = arith.constant 0 : i32
    return %arg0, %arg1, %c0_i32, %c0_i32_0 : i32, i32, i32, i32
  }
  func.func @transform_1(%arg0: i32, %arg1: i32) -> (i32, i32, i32, i32) {
    %c0_i32 = arith.constant 0 : i32
    %c0_i32_0 = arith.constant 0 : i32
    %c0_i32_1 = arith.constant 0 : i32
    return %arg0, %arg1, %c0_i32, %c0_i32_0 : i32, i32, i32, i32
  }
  func.func @transform_2(%arg0: i32, %arg1: i32) -> (i32, i32, i32) {
    %c0_i32 = arith.constant 0 : i32
    %c0_i32_0 = arith.constant 0 : i32
    %c0_i32_1 = arith.constant 0 : i32
    return %arg0, %c0_i32, %c0_i32_0 : i32, i32, i32
  }
}

</mosaic_0001>

<llo_original>
// kernel: tpu_custom_call.1
$region0: #{tpu_custom_call.1}
  #allocation0 [shape = 'u32[]', space=smem, size = 0x4, offset = 0x4, fixed_abs, tag = 'smem constant byte address 0x4 - core index']
  #allocation1 [shape = 'u32[144,128]{1,0:T(1,128)}', space=vmem, size = 0x12000, scoped, tag = 'internal scratch']
  %s0 = inlined_call_operand.hbm [shape: f32[3,2,8,128], index: 0, kind: input, shape index: {}]
  %s1 = inlined_call_operand.hbm [shape: f32[3,2,8,128], index: 1, kind: input, shape index: {}]
  %s2 = inlined_call_operand.hbm [shape: f32[3,8,128], index: 2, kind: output, shape index: {}]
  %s3 = sld [smem:[#allocation0]]
  $region53: #{tpu_custom_call.1} parent=0
    _
  %s5 = ssub.s32 1, %s3
  %s6 = scalar_select 0, %s5, %s3
  $region1: #{tpu_custom_call.1} parent=0
    #allocation2 [shape = 'u8[8192]{0}', space=vmem, size = 0x2000, scoped, tag = 'input window, operand 0']
    #allocation3 [shape = 's32[2]{0}', space=sflag, size = 0x8, scoped, tag = 'scoped memory for tpu_custom_call.1']
    #allocation4 [shape = 's32[2]{0}', space=sflag, size = 0x8, scoped, tag = 'scoped memory for tpu_custom_call.1']
    #allocation5 [shape = 'u8[8192]{0}', space=vmem, size = 0x2000, scoped, tag = 'input window, operand 1']
    #allocation6 [shape = 's32[2]{0}', space=sflag, size = 0x8, scoped, tag = 'scoped memory for tpu_custom_call.1']
    #allocation7 [shape = 'u8[8192]{0}', space=vmem, size = 0x2000, scoped, tag = 'output window, operand 0']
    %7 = vsyncpa [#allocation3], 0
    %s8 = scalar_lea.sflag [#allocation3], 1
    %9 = vsyncpa %s8, 0
    %10 = vsyncpa [#allocation6], 0
    %s11 = scalar_lea.sflag [#allocation6], 1
    %12 = vsyncpa %s11, 0
    %13 = vsyncpa [#allocation4], 0
    %s14 = scalar_lea.sflag [#allocation4], 1
    %15 = vsyncpa %s14, 0
    loop: start=0, step=1, limit=8
    $region2: #{tpu_custom_call.1} parent=1 // loop_pre_header
      _
    $region3: #{tpu_custom_call.1} parent=1 // loop_header
      %s17 = sphi 0, %s21
      %p18 = scmp.ge.s32.totalorder %s17, 8
      %s24 = sphi 0, %s36
      %s25 = sphi 0, %s32
      %s26 = sphi 0, %s24
      %s27 = sphi 0, %s25
      %s28 = sphi 0, %s26
      %s29 = sphi 0, %s27
      %s41 = sphi 0, %s43
      %s44 = sphi 0, %s41
      %s45 = sphi 0, %s44
      %s61 = sphi 0, %s45
      %s69 = sphi 0, %s71
      %s72 = sphi 0, %s69
      %s73 = sphi 0, %s72
      %s89 = sphi 0, %s73
      %s95 = sphi 0, %s97
      %s98 = sphi 0, %s95
      %s99 = sphi 0, %s98
      %s115 = sphi 0, %s99
    $region4: #{tpu_custom_call.1} parent=1 // loop_header_branch
      %20 = sbr.rel (%p18) target = $region8
    $region5: #{tpu_custom_call.1} parent=1 // loop_body
      %s22 = ssub.s32 %s17, 1
      %s23 = ssub.s32 %s17, 2
      %s30 = sadd.s32 1, %s25
      %p31 = scmp.ge.s32.totalorder %s30, 2
      %s32 = scalar_select %p31, 0, %s30
      %s33 = sadd.s32 1, %s24
      %s34 = scalar_select %p31, %s33, %s24
      %p35 = scmp.ge.s32.totalorder %s34, 3
      %s36 = scalar_select %p35, 0, %s34
      %s37 = ssub.s32 %s24, %s36
      %s38 = ssub.s32 %s25, %s32
      %s39 = sor.u32 %s37, %s38
      %p40 = scmp.eq.s32.totalorder %s39, 0
      %s42 = sadd.s32 %s41, 1
      %s43 = scalar_select %p40, %s41, %s42
      %p46 = pneg %p40
      %p47 = scmp.eq.s32.totalorder %s17, 5
      %p48 = por %p46, %p47
      %p49 = scmp.ne.s32.totalorder %s41, %s44
      %p50 = scmp.eq.s32.totalorder %s17, 0
      %p51 = por %p49, %p50
      %p52 = scmp.ne.s32.totalorder %s41, %s44
      %p53 = scmp.eq.s32.totalorder %s22, 5
      %p54 = por %p52, %p53
      %p55 = scmp.ne.s32.totalorder %s44, %s45
      %p56 = scmp.eq.s32.totalorder %s22, 0
      %p57 = por %p55, %p56
      %p58 = scmp.ne.s32.totalorder %s44, %s45
      %p59 = scmp.eq.s32.totalorder %s23, 5
      %p60 = por %p58, %p59
      %p62 = scmp.ne.s32.totalorder %s45, %s61
      %p63 = scmp.eq.s32.totalorder %s23, 0
      %p64 = por %p62, %p63
      %s65 = ssub.s32 %s24, %s36
      %s66 = ssub.s32 %s25, %s32
      %s67 = sor.u32 %s65, %s66
      %p68 = scmp.eq.s32.totalorder %s67, 0
      %s70 = sadd.s32 %s69, 1
      %s71 = scalar_select %p68, %s69, %s70
      %p74 = pneg %p68
      %p75 = scmp.eq.s32.totalorder %s17, 5
      %p76 = por %p74, %p75
      %p77 = scmp.ne.s32.totalorder %s69, %s72
      %p78 = scmp.eq.s32.totalorder %s17, 0
      %p79 = por %p77, %p78
      %p80 = scmp.ne.s32.totalorder %s69, %s72
      %p81 = scmp.eq.s32.totalorder %s22, 5
      %p82 = por %p80, %p81
      %p83 = scmp.ne.s32.totalorder %s72, %s73
      %p84 = scmp.eq.s32.totalorder %s22, 0
      %p85 = por %p83, %p84
      %p86 = scmp.ne.s32.totalorder %s72, %s73
      %p87 = scmp.eq.s32.totalorder %s23, 5
      %p88 = por %p86, %p87
      %p90 = scmp.ne.s32.totalorder %s73, %s89
      %p91 = scmp.eq.s32.totalorder %s23, 0
      %p92 = por %p90, %p91
      %s93 = ssub.s32 %s24, %s36
      %p94 = scmp.eq.s32.totalorder %s93, 0
      %s96 = sadd.s32 %s95, 1
      %s97 = scalar_select %p94, %s95, %s96
      %p100 = pneg %p94
      %p101 = scmp.eq.s32.totalorder %s17, 5
      %p102 = por %p100, %p101
      %p103 = scmp.ne.s32.totalorder %s95, %s98
      %p104 = scmp.eq.s32.totalorder %s17, 0
      %p105 = por %p103, %p104
      %p106 = scmp.ne.s32.totalorder %s95, %s98
      %p107 = scmp.eq.s32.totalorder %s22, 5
      %p108 = por %p106, %p107
      %p109 = scmp.ne.s32.totalorder %s98, %s99
      %p110 = scmp.eq.s32.totalorder %s22, 0
      %p111 = por %p109, %p110
      %p112 = scmp.ne.s32.totalorder %s98, %s99
      %p113 = scmp.eq.s32.totalorder %s23, 5
      %p114 = por %p112, %p113
      %p116 = scmp.ne.s32.totalorder %s99, %s115
      %p117 = scmp.eq.s32.totalorder %s23, 0
      %p118 = por %p116, %p117
      %p119 = scmp.le.s32.totalorder 1, %s17
      %p120 = scmp.lt.s32.totalorder %s17, 7
      %p121 = pnand %p119, %p120
      %p122 = pneg %p121
      // Predicated region
      $region9: #{tpu_custom_call.1} parent=5 // pred_check
        _
      $region10: #{tpu_custom_call.1} parent=5 // pred_check_branch
        %124 = sbr.rel (%p121) target = $region12
      $region11: #{tpu_custom_call.1} parent=5 // pred_region
        %s125 = ssub.s32 %s17, 1
      $region12: #{tpu_custom_call.1} parent=5 // pred_fallthru
        _
      %p126 = scmp.lt.s32.totalorder %s17, 6
      // Predicated region
      $region13: #{tpu_custom_call.1} parent=5 // pred_check
        %p127 = pneg %p126
      $region14: #{tpu_custom_call.1} parent=5 // pred_check_branch
        %129 = sbr.rel (%p127) target = $region16
      $region15: #{tpu_custom_call.1} parent=5 // pred_region
        // Predicated region
        $region17: #{tpu_custom_call.1} parent=15 // pred_check
          %p130 = pneg %p51
        $region18: #{tpu_custom_call.1} parent=15 // pred_check_branch
          %132 = sbr.rel (%p130) target = $region20
        $region19: #{tpu_custom_call.1} parent=15 // pred_region
          %s133 = sand.u32 %s41, 1
          %s134 = scalar_lea.sflag [#allocation3], %s133
          %s135 = sand.u32 %s41, 1
          %s136 = smul.addr %s135, 8
          %s137 = scalar_lea.vmem [#allocation2], %s136
          %s139 = ssub.s32 128, 128
          %140 = vsyncadd %s134, %s139
          %s141 = smul.addr %s24, 2
          %s142 = sadd.s32 %s25, %s141
          %s143 = smul.addr %s142, 128
          %s144 = scalar_lea.hbm %s0, %s143
          %s146 = sshll.u32 %s137, 4
          %s147 = int_to_ptr.vmem [resolvable:$true] %s146
          %149 = dma.hbm_to_vmem [thread:$0]  %s144, 128, %s147, %s134
        $region20: #{tpu_custom_call.1} parent=15 // pred_fallthru
          _
        // Predicated region
        $region21: #{tpu_custom_call.1} parent=15 // pred_check
          %p150 = pneg %p79
        $region22: #{tpu_custom_call.1} parent=15 // pred_check_branch
          %152 = sbr.rel (%p150) target = $region24
        $region23: #{tpu_custom_call.1} parent=15 // pred_region
          %s153 = sand.u32 %s69, 1
          %s154 = scalar_lea.sflag [#allocation6], %s153
          %s155 = sand.u32 %s69, 1
          %s156 = smul.addr %s155, 8
          %s157 = scalar_lea.vmem [#allocation5], %s156
          %s159 = ssub.s32 128, 128
          %160 = vsyncadd %s154, %s159
          %s161 = smul.addr %s24, 2
          %s162 = sadd.s32 %s25, %s161
          %s163 = smul.addr %s162, 128
          %s164 = scalar_lea.hbm %s1, %s163
          %s166 = sshll.u32 %s157, 4
          %s167 = int_to_ptr.vmem [resolvable:$true] %s166
          %169 = dma.hbm_to_vmem [thread:$0]  %s164, 128, %s167, %s154
        $region24: #{tpu_custom_call.1} parent=15 // pred_fallthru
          _
      $region16: #{tpu_custom_call.1} parent=5 // pred_fallthru
        _
      %p170 = scmp.le.s32.totalorder 1, %s17
      %p171 = scmp.lt.s32.totalorder %s17, 7
      %p172 = pnand %p170, %p171
      %p173 = pneg %p172
      // Predicated region
      $region25: #{tpu_custom_call.1} parent=5 // pred_check
        _
      $region26: #{tpu_custom_call.1} parent=5 // pred_check_branch
        %175 = sbr.rel (%p172) target = $region28
      $region27: #{tpu_custom_call.1} parent=5 // pred_region
        %s176 = ssub.s32 %s17, 1
        %s177 = sand.u32 %s44, 1
        %s178 = scalar_lea.sflag [#allocation3], %s177
        %s179 = sand.u32 %s44, 1
        %s180 = smul.addr %s179, 8
        %s181 = scalar_lea.vmem [#allocation2], %s180
        // Predicated region
        $region29: #{tpu_custom_call.1} parent=27 // pred_check
          %p182 = pneg %p57
        $region30: #{tpu_custom_call.1} parent=27 // pred_check_branch
          %184 = sbr.rel (%p182) target = $region32
        $region31: #{tpu_custom_call.1} parent=27 // pred_region
          %185 = dma.done %s178, 128
        $region32: #{tpu_custom_call.1} parent=27 // pred_fallthru
          _
        %s186 = sand.u32 %s72, 1
        %s187 = scalar_lea.sflag [#allocation6], %s186
        %s188 = sand.u32 %s72, 1
        %s189 = smul.addr %s188, 8
        %s190 = scalar_lea.vmem [#allocation5], %s189
        // Predicated region
        $region33: #{tpu_custom_call.1} parent=27 // pred_check
          %p191 = pneg %p85
        $region34: #{tpu_custom_call.1} parent=27 // pred_check_branch
          %193 = sbr.rel (%p191) target = $region36
        $region35: #{tpu_custom_call.1} parent=27 // pred_region
          %194 = dma.done %s187, 128
        $region36: #{tpu_custom_call.1} parent=27 // pred_fallthru
          _
        %s195 = sand.u32 %s44, 1
        %s196 = scalar_lea.sflag [#allocation3], %s195
        %s197 = sand.u32 %s44, 1
        %s198 = smul.addr %s197, 8
        %s199 = scalar_lea.vmem [#allocation2], %s198
        %p200 = pneg %p57
        %p201 = pneg %p54
        %s202 = sand.u32 %s72, 1
        %s203 = scalar_lea.sflag [#allocation6], %s202
        %s204 = sand.u32 %s72, 1
        %s205 = smul.addr %s204, 8
        %s206 = scalar_lea.vmem [#allocation5], %s205
        %p207 = pneg %p85
        %p208 = pneg %p82
        %p209 = pneg %p111
        %p210 = pneg %p108
        %s211 = sand.u32 %s98, 1
        %s212 = scalar_lea.sflag [#allocation4], %s211
        %s213 = sand.u32 %s98, 1
        %s214 = smul.addr %s213, 8
        %s215 = scalar_lea.vmem [#allocation7], %s214
        %p216 = scmp.eq.s32.totalorder %s27, 0
        // Predicated region
        $region37: #{tpu_custom_call.1} parent=27 // pred_check
          %p217 = pneg %p216
        $region38: #{tpu_custom_call.1} parent=27 // pred_check_branch
          %219 = sbr.rel (%p217) target = $region40
        $region39: #{tpu_custom_call.1} parent=27 // pred_region
          %220 = vst [vmem:[%s215] sm:$0xff] 0.0
        $region40: #{tpu_custom_call.1} parent=27 // pred_fallthru
          _
        %v221 = vld [vmem:[%s181] sm:$0xff]
        %v222 = vld [vmem:[%s190] sm:$0xff]
        %vm223 = vcmp.ge.f32.partialorder %v222, 0.0
        %v224 = vsel %vm223, %v222, 0.0
        %v225 = vxor.u32 %v221, 2147483648
        %v226 = vmul.f32 %v225, 1.442695
        %v227 = vpow.pop %v226
        %v228 = vadd.f32 %v227, 1.0
        %v229 = vrcp.pop %v228
        %v230 = vmul.f32 1.0, %v229
        %v231 = vxor.u32 %v230, 2147483648
        %v232 = vmul.f32 %v231, 1.442695
        %v233 = vpow.pop %v232
        %v234 = vadd.f32 %v233, 1.0
        %v235 = vrcp.pop %v234
        %v236 = vmul.f32 1.0, %v235
        %v237 = vsel %vm223, %v230, 0.0
        %v238 = vsel %vm223, %v236, 0.0
        %v239 = vmax.f32 %v221, 0.0
        %v240 = vmul.f32 %v221, %v224
        %v241 = vsub.f32 %v239, %v240
        %v242 = vand.u32 2147483647, %v221
        %v243 = vsub.f32 0.0, %v242
        %v244 = vmul.f32 %v243, 1.442695
        %v245 = vpow.pop %v244
        %v246 = vadd.f32 %v245, 1.0
        %v247 = vlog2.pop %v246
        %v248 = vmul.f32 %v247, 0.6931472
        %v249 = vadd.f32 %v241, %v248
        %v250 = vsel %vm223, %v249, 0.0
        %vm251 = vcmp.ne.f32.partialorder %v222, 255.0
        %vm252 = vmand %vm223, %vm251
        %v253 = vmax.f32 %v230, 1e-08
        %v254 = vmin.f32 %v253, 1.0
        %v255 = vmax.f32 %v224, 1e-08
        %v256 = vmin.f32 %v255, 1.0
        %v257 = vsub.f32 1.0, %v256
        %v258 = vsub.f32 1.0, %v254
        %v259 = vmul.f32 %v257, %v258
        %v260 = vmul.f32 %v256, %v254
        %v261 = vadd.f32 %v259, %v260
        %v262 = vsub.f32 1.0, %v261
        %v263 = vmul.f32 %v262, %v262
        %v264 = vsub.f32 0.0, %v263
        %v265 = vlog2.pop %v261
        %v266 = vmul.f32 %v265, 0.6931472
        %v267 = vmul.f32 %v264, %v266
        %v268 = vsel %vm252, %v267, 0.0
        %v269 = vsel %vm252, 1.0, 0.0
        %v270 = vmul.f32 %v237, %v224
        %v271 = vmul.f32 %v238, %v224
        %v272 = vld [vmem:[%s215] sm:$0x1]
        %v273 = vrot.slane %v270, 4
        %v274 = vadd.f32 %v270, %v273
        %v275 = vrot.slane %v274, 2
        %v276 = vadd.f32 %v274, %v275
        %v277 = vrot.slane %v276, 1
        %v278 = vadd.f32 %v276, %v277
        %v279 = vadd.f32 %v272, %v278
        %280 = vst [vmem:[%s215] sm:$0x1] %v279
        %v281 = vld [vmem:[%s215 + $0x1] sm:$0x1]
        %v282 = vrot.slane %v237, 4
        %v283 = vadd.f32 %v237, %v282
        %v284 = vrot.slane %v283, 2
        %v285 = vadd.f32 %v283, %v284
        %v286 = vrot.slane %v285, 1
        %v287 = vadd.f32 %v285, %v286
        %v288 = vadd.f32 %v281, %v287
        %289 = vst [vmem:[%s215 + $0x1] sm:$0x1] %v288
        %v290 = vld [vmem:[%s215 + $0x2] sm:$0x1]
        %v291 = vrot.slane %v271, 4
        %v292 = vadd.f32 %v271, %v291
        %v293 = vrot.slane %v292, 2
        %v294 = vadd.f32 %v292, %v293
        %v295 = vrot.slane %v294, 1
        %v296 = vadd.f32 %v294, %v295
        %v297 = vadd.f32 %v290, %v296
        %298 = vst [vmem:[%s215 + $0x2] sm:$0x1] %v297
        %v299 = vld [vmem:[%s215 + $0x3] sm:$0x1]
        %v300 = vrot.slane %v238, 4
        %v301 = vadd.f32 %v238, %v300
        %v302 = vrot.slane %v301, 2
        %v303 = vadd.f32 %v301, %v302
        %v304 = vrot.slane %v303, 1
        %v305 = vadd.f32 %v303, %v304
        %v306 = vadd.f32 %v299, %v305
        %307 = vst [vmem:[%s215 + $0x3] sm:$0x1] %v306
        %v308 = vld [vmem:[%s215 + $0x4] sm:$0x1]
        %v309 = vrot.slane %v224, 4
        %v310 = vadd.f32 %v224, %v309
        %v311 = vrot.slane %v310, 2
        %v312 = vadd.f32 %v310, %v311
        %v313 = vrot.slane %v312, 1
        %v314 = vadd.f32 %v312, %v313
        %v315 = vadd.f32 %v308, %v314
        %316 = vst [vmem:[%s215 + $0x4] sm:$0x1] %v315
        %v317 = vld [vmem:[%s215 + $0x5] sm:$0x1]
        %v318 = vrot.slane %v250, 4
        %v319 = vadd.f32 %v250, %v318
        %v320 = vrot.slane %v319, 2
        %v321 = vadd.f32 %v319, %v320
        %v322 = vrot.slane %v321, 1
        %v323 = vadd.f32 %v321, %v322
        %v324 = vadd.f32 %v317, %v323
        %325 = vst [vmem:[%s215 + $0x5] sm:$0x1] %v324
        %v326 = vld [vmem:[%s215 + $0x6] sm:$0x1]
        %v327 = vrot.slane %v268, 4
        %v328 = vadd.f32 %v268, %v327
        %v329 = vrot.slane %v328, 2
        %v330 = vadd.f32 %v328, %v329
        %v331 = vrot.slane %v330, 1
        %v332 = vadd.f32 %v330, %v331
        %v333 = vadd.f32 %v326, %v332
        %334 = vst [vmem:[%s215 + $0x6] sm:$0x1] %v333
        %v335 = vld [vmem:[%s215 + $0x7] sm:$0x1]
        %v336 = vrot.slane %v269, 4
        %v337 = vadd.f32 %v269, %v336
        %v338 = vrot.slane %v337, 2
        %v339 = vadd.f32 %v337, %v338
        %v340 = vrot.slane %v339, 1
        %v341 = vadd.f32 %v339, %v340
        %v342 = vadd.f32 %v335, %v341
        %343 = vst [vmem:[%s215 + $0x7] sm:$0x1] %v342
        %s344 = sand.u32 %s98, 1
        %s345 = scalar_lea.sflag [#allocation4], %s344
        %s346 = sand.u32 %s98, 1
        %s347 = smul.addr %s346, 8
        %s348 = scalar_lea.vmem [#allocation7], %s347
        // Predicated region
        $region41: #{tpu_custom_call.1} parent=27 // pred_check
          %p349 = pneg %p108
        $region42: #{tpu_custom_call.1} parent=27 // pred_check_branch
          %351 = sbr.rel (%p349) target = $region44
        $region43: #{tpu_custom_call.1} parent=27 // pred_region
          %s353 = ssub.s32 128, 128
          %354 = vsyncadd %s345, %s353
          %s355 = smul.addr %s26, 128
          %s356 = scalar_lea.hbm %s2, %s355
          %s358 = sshll.u32 %s348, 4
          %s359 = int_to_ptr.vmem [resolvable:$true] %s358
          %361 = dma.vmem_to_hbm [thread:$0]  %s359, 128, %s356, %s345
        $region44: #{tpu_custom_call.1} parent=27 // pred_fallthru
          _
      $region28: #{tpu_custom_call.1} parent=5 // pred_fallthru
        _
      %p362 = scmp.le.s32.totalorder 2, %s17
      // Predicated region
      $region45: #{tpu_custom_call.1} parent=5 // pred_check
        %p363 = pneg %p362
      $region46: #{tpu_custom_call.1} parent=5 // pred_check_branch
        %365 = sbr.rel (%p363) target = $region48
      $region47: #{tpu_custom_call.1} parent=5 // pred_region
        %s366 = ssub.s32 %s17, 2
        // Predicated region
        $region49: #{tpu_custom_call.1} parent=47 // pred_check
          %p367 = pneg %p114
        $region50: #{tpu_custom_call.1} parent=47 // pred_check_branch
          %369 = sbr.rel (%p367) target = $region52
        $region51: #{tpu_custom_call.1} parent=47 // pred_region
          %s370 = sand.u32 %s99, 1
          %s371 = scalar_lea.sflag [#allocation4], %s370
          %s372 = sand.u32 %s99, 1
          %s373 = smul.addr %s372, 8
          %s374 = scalar_lea.vmem [#allocation7], %s373
          %375 = dma.done %s371, 128
        $region52: #{tpu_custom_call.1} parent=47 // pred_fallthru
          _
      $region48: #{tpu_custom_call.1} parent=5 // pred_fallthru
        _
    $region6: #{tpu_custom_call.1} parent=1 // loop_footer
      %s21 = sadd.s32 1, %s17
    $region7: #{tpu_custom_call.1} parent=1 // loop_footer_branch
      %16 = sbr.rel target = $region3
    $region8: #{tpu_custom_call.1} parent=1 // loop_exit
      _
    %376 = vsyncpa [#allocation3], 1
    %s377 = scalar_lea.sflag [#allocation3], 1
    %378 = vsyncpa %s377, 1
    %379 = vsyncpa [#allocation6], 1
    %s380 = scalar_lea.sflag [#allocation6], 1
    %381 = vsyncpa %s380, 1
    %382 = vsyncpa [#allocation4], 1
    %s383 = scalar_lea.sflag [#allocation4], 1
    %384 = vsyncpa %s383, 1

</llo_original>
